<compile_context>
chip_gen: v6e
topology: v6e:2x2x1
jax: 0.10.0
libtpu: 0.0.40
codegen_flags: <defaults>
</compile_context>

<pallas_src>
import functools

import jax
import jax.numpy as jnp
from jax.experimental import pallas as pl
from jax.experimental.pallas import tpu as pltpu


def _layernorm_kernel(x_ref, g_ref, b_ref, o_ref, *, eps, c):
    # x_ref/o_ref: (N_TILE, C, R_TILE, 128); g_ref/b_ref: (1, C, 1, 1)
    x = x_ref[...].astype(jnp.float32)
    g = g_ref[...].astype(jnp.float32)
    b = b_ref[...].astype(jnp.float32)

    # Two-pass (centered) moments over the channel axis.  The channel axis is
    # a leading (non-minor) axis of the block, so the reduction lowers to
    # plain per-vreg VALU adds -- no cross-sublane XLU work.
    mean = jnp.sum(x, axis=1, keepdims=True) * (1.0 / c)
    xc = x - mean
    # Unbiased variance (torch.std default, ddof=1).  Requires C >= 2.
    var = jnp.sum(xc * xc, axis=1, keepdims=True) * (1.0 / (c - 1))
    std = jnp.sqrt(var)

    # One reciprocal per (row, lane) column on the EUP instead of C divides.
    # approx=False keeps ~1e-6 parity with the torch reference.
    inv = pl.reciprocal(std + eps, approx=False)

    o_ref[...] = (xc * inv * g + b).astype(o_ref.dtype)


def _vmem_capacity_bytes():
    try:
        return int(pltpu.get_tpu_info().vmem_capacity_bytes)
    except Exception:
        return 64 << 20  # v7x per-TensorCore VMEM: smallest across generations


def _pick_tiles(n, c, rows, itemsize):
    """Choose (n_tile, r_tile, rows_padded, vmem_limit_bytes).

    `rows` = padded-L // 128.  Targets a ~1-2 MiB input block so per-grid-step
    bytes are in the MiB range (long DMA bursts, amortized step overhead) while
    the double-buffered in+out buffers plus f32 intermediates stay well inside
    the scoped VMEM limit on every TPU generation.
    """
    cap = _vmem_capacity_bytes()
    block_budget = max(128 * 128 * itemsize, min(2 << 20, cap // 16))
    row_bytes = c * 128 * itemsize              # one (C, 1, 128) slab
    r_max = max(1, block_budget // row_bytes)

    if rows <= r_max:
        # Whole (padded) L fits in one block: fold batches to lengthen DMAs.
        r_tile = rows
        rows_padded = rows
        per_batch = rows * row_bytes
        n_budget = max(1, block_budget // per_batch)
        n_tile = 1
        for d in range(min(n, n_budget), 0, -1):
            if n % d == 0:
                n_tile = d
                break
    else:
        n_tile = 1
        r_tile = max(8, (r_max // 8) * 8)       # multiple of 8 sublanes
        rows_padded = ((rows + r_tile - 1) // r_tile) * r_tile

    block_bytes = n_tile * r_tile * row_bytes
    block_f32 = n_tile * r_tile * c * 128 * 4
    # in + out double-buffered (4 blocks) + f32 intermediates + small slack.
    needed = 4 * block_bytes + 4 * block_f32 + (1 << 20)
    vmem_limit = int(min(cap, max(32 << 20, needed)))
    return n_tile, r_tile, rows_padded, vmem_limit


def layer_norm(x, gamma, beta, eps=1e-6):
    """x: (N, C, L), gamma/beta: (1, C, 1). Returns (N, C, L)."""
    N, C, L = x.shape
    if C < 2:
        # TODO(synk): torch returns NaN for C == 1 (ddof=1); we reject instead.
        raise ValueError("LayerNorm over channels requires C >= 2 (ddof=1).")

    itemsize = jnp.dtype(x.dtype).itemsize
    rows = -(-L // 128)                          # ceil(L / 128)
    n_tile, r_tile, rows_padded, vmem_limit = _pick_tiles(N, C, rows, itemsize)

    # Pad the sequence axis so the lane dim is a full 128 and the row count is
    # a multiple of the row tile.  Padded positions normalize over zeros
    # (finite result == beta) and are sliced away below, so every store in the
    # kernel is a full, unmasked lane-dense store.
    L_total = rows_padded * 128
    if L_total != L:
        x = jnp.pad(x, ((0, 0), (0, 0), (0, L_total - L)))

    # (N, C, L_total) -> (N, C, rows_padded, 128): free, contiguous reshape.
    xr = x.reshape(N, C, rows_padded, 128)
    g = jnp.reshape(gamma, (1, C, 1, 1))
    b = jnp.reshape(beta, (1, C, 1, 1))

    grid = (rows_padded // r_tile, N // n_tile)  # long axis first (megacore)
    kernel = functools.partial(_layernorm_kernel, eps=eps, c=C)

    out = pl.pallas_call(
        kernel,
        out_shape=jax.ShapeDtypeStruct((N, C, rows_padded, 128), x.dtype),
        grid=grid,
        in_specs=[
            pl.BlockSpec((n_tile, C, r_tile, 128), lambda r, nb: (nb, 0, r, 0)),
            pl.BlockSpec((1, C, 1, 1), lambda r, nb: (0, 0, 0, 0)),
            pl.BlockSpec((1, C, 1, 1), lambda r, nb: (0, 0, 0, 0)),
        ],
        out_specs=pl.BlockSpec((n_tile, C, r_tile, 128),
                               lambda r, nb: (nb, 0, r, 0)),
        compiler_params=pltpu.CompilerParams(
            dimension_semantics=("parallel", "parallel"),
            vmem_limit_bytes=vmem_limit),
    )(xr, g, b)

    out = out.reshape(N, C, L_total)
    if L_total != L:
        out = out[:, :, :L]
    return out


def layer_norm_ref(x, gamma, beta, eps=1e-6):
    # Pure-JAX reference matching torch semantics (std with ddof=1).
    mean = jnp.mean(x, axis=1, keepdims=True)
    std = jnp.std(x, axis=1, keepdims=True, ddof=1)
    return gamma * (x - mean) / (std + eps) + beta


if __name__ == "__main__":
    key = jax.random.PRNGKey(0)
    k1, k2, k3 = jax.random.split(key, 3)

    # --- Small shape consistent with the module: (batch=2, features=4, seq=16)
    N, C, L = 2, 4, 16
    x = jax.random.normal(k1, (N, C, L), dtype=jnp.float32)
    gamma = jnp.ones((1, C, 1), dtype=jnp.float32)   # nn.Parameter(torch.ones)
    beta = jnp.zeros((1, C, 1), dtype=jnp.float32)   # nn.Parameter(torch.zeros)
    out = jax.block_until_ready(layer_norm(x, gamma, beta))
    ref = layer_norm_ref(x, gamma, beta)
    assert out.shape == (N, C, L)
    assert jnp.allclose(out, ref, atol=1e-5, rtol=1e-5), "mismatch (small)"

    # --- Lane-dense multi-row path with batch folding (L multiple of 128).
    N2, C2, L2 = 2, 8, 2048
    x2 = jax.random.normal(k2, (N2, C2, L2), dtype=jnp.float32) * 3.0 + 1.5
    gamma2 = jax.random.normal(k3, (1, C2, 1), dtype=jnp.float32)
    beta2 = jax.random.normal(k1, (1, C2, 1), dtype=jnp.float32)
    out2 = jax.block_until_ready(layer_norm(x2, gamma2, beta2))
    ref2 = layer_norm_ref(x2, gamma2, beta2)
    assert out2.shape == (N2, C2, L2)
    assert jnp.allclose(out2, ref2, atol=1e-4, rtol=1e-4), "mismatch (tiled)"

    # --- Awkward L (not a multiple of 128) exercises the padding path.
    N3, C3, L3 = 2, 6, 200
    x3 = jax.random.normal(k2, (N3, C3, L3), dtype=jnp.float32)
    gamma3 = jnp.ones((1, C3, 1), dtype=jnp.float32)
    beta3 = jnp.zeros((1, C3, 1), dtype=jnp.float32)
    out3 = jax.block_until_ready(layer_norm(x3, gamma3, beta3))
    ref3 = layer_norm_ref(x3, gamma3, beta3)
    assert out3.shape == (N3, C3, L3)
    assert jnp.allclose(out3, ref3, atol=1e-5, rtol=1e-5), "mismatch (padded)"

    print("KERNEL_OK")
</pallas_src>

<mosaic_0001>
module attributes {stable_mosaic.version = 11 : i64} {
  func.func @_layernorm_kernel(%arg0: i32, %arg1: i32, %arg2: memref<2x4x1x128xf32, #tpu.memory_space<vmem>>, %arg3: memref<1x4x1x1xf32, #tpu.memory_space<vmem>>, %arg4: memref<1x4x1x1xf32, #tpu.memory_space<vmem>>, %arg5: memref<2x4x1x128xf32, #tpu.memory_space<vmem>>) attributes {dimension_semantics = [#tpu.dimension_semantics<parallel>, #tpu.dimension_semantics<parallel>], iteration_bounds = array<i64: 1, 1>, scalar_prefetch = 0 : i64, scratch_operands = 0 : i64, tpu.core_type = #tpu.core_type<tc>, window_params = [{transform_indices = @transform_0, window_bounds = array<i64: 2, 4, 1, 128>}, {pipeline_mode = #tpu.pipeline_mode<synchronous>, transform_indices = @transform_1, window_bounds = array<i64: 1, 4, 1, 1>}, {pipeline_mode = #tpu.pipeline_mode<synchronous>, transform_indices = @transform_2, window_bounds = array<i64: 1, 4, 1, 1>}, {transform_indices = @transform_3, window_bounds = array<i64: 2, 4, 1, 128>}]} {
    %c0 = arith.constant 0 : index
    %c0_0 = arith.constant 0 : index
    %c0_1 = arith.constant 0 : index
    %c0_2 = arith.constant 0 : index
    %0 = vector.load %arg2[%c0, %c0_0, %c0_1, %c0_2] : memref<2x4x1x128xf32, #tpu.memory_space<vmem>>, vector<2x4x1x128xf32>
    %c0_3 = arith.constant 0 : index
    %c0_4 = arith.constant 0 : index
    %c0_5 = arith.constant 0 : index
    %c0_6 = arith.constant 0 : index
    %1 = vector.load %arg3[%c0_3, %c0_4, %c0_5, %c0_6] : memref<1x4x1x1xf32, #tpu.memory_space<vmem>>, vector<1x4x1x1xf32>
    %c0_7 = arith.constant 0 : index
    %c0_8 = arith.constant 0 : index
    %c0_9 = arith.constant 0 : index
    %c0_10 = arith.constant 0 : index
    %2 = vector.load %arg4[%c0_7, %c0_8, %c0_9, %c0_10] : memref<1x4x1x1xf32, #tpu.memory_space<vmem>>, vector<1x4x1x1xf32>
    %cst = arith.constant dense<0.000000e+00> : vector<2x1x128xf32>
    %3 = vector.multi_reduction <add>, %0, %cst [1] : vector<2x4x1x128xf32> to vector<2x1x128xf32>
    %4 = vector.shape_cast %3 : vector<2x1x128xf32> to vector<2x1x1x128xf32>
    %cst_11 = arith.constant 2.500000e-01 : f32
    %5 = vector.broadcast %cst_11 : f32 to vector<2x1x1x128xf32>
    %6 = arith.mulf %4, %5 : vector<2x1x1x128xf32>
    %7 = vector.broadcast %6 : vector<2x1x1x128xf32> to vector<2x4x1x128xf32>
    %8 = arith.subf %0, %7 : vector<2x4x1x128xf32>
    %9 = arith.mulf %8, %8 : vector<2x4x1x128xf32>
    %cst_12 = arith.constant dense<0.000000e+00> : vector<2x1x128xf32>
    %10 = vector.multi_reduction <add>, %9, %cst_12 [1] : vector<2x4x1x128xf32> to vector<2x1x128xf32>
    %11 = vector.shape_cast %10 : vector<2x1x128xf32> to vector<2x1x1x128xf32>
    %cst_13 = arith.constant 0.333333343 : f32
    %12 = vector.broadcast %cst_13 : f32 to vector<2x1x1x128xf32>
    %13 = arith.mulf %11, %12 : vector<2x1x1x128xf32>
    %14 = math.sqrt %13 : vector<2x1x1x128xf32>
    %cst_14 = arith.constant 9.99999997E-7 : f32
    %15 = vector.broadcast %cst_14 : f32 to vector<2x1x1x128xf32>
    %16 = arith.addf %14, %15 : vector<2x1x1x128xf32>
    %17 = tpu.reciprocal %16 : vector<2x1x1x128xf32> -> vector<2x1x1x128xf32>
    %18 = vector.broadcast %17 : vector<2x1x1x128xf32> to vector<2x4x1x128xf32>
    %19 = arith.mulf %8, %18 : vector<2x4x1x128xf32>
    %20 = vector.broadcast %1 : vector<1x4x1x1xf32> to vector<2x4x1x128xf32>
    %21 = arith.mulf %19, %20 : vector<2x4x1x128xf32>
    %22 = vector.broadcast %2 : vector<1x4x1x1xf32> to vector<2x4x1x128xf32>
    %23 = arith.addf %21, %22 : vector<2x4x1x128xf32>
    %c0_15 = arith.constant 0 : index
    %c0_16 = arith.constant 0 : index
    %c0_17 = arith.constant 0 : index
    %c0_18 = arith.constant 0 : index
    %24 = vector.load %arg5[%c0_15, %c0_16, %c0_17, %c0_18] : memref<2x4x1x128xf32, #tpu.memory_space<vmem>>, vector<2x4x1x128xf32>
    tpu.vector_store %arg5[%c0_15, %c0_16, %c0_17, %c0_18], %23 {strides = array<i32>} : memref<2x4x1x128xf32, #tpu.memory_space<vmem>>, vector<2x4x1x128xf32>,
    return
  }
  func.func @transform_0(%arg0: i32, %arg1: i32) -> (i32, i32, i32, i32) {
    %c0_i32 = arith.constant 0 : i32
    %c0_i32_0 = arith.constant 0 : i32
    %c0_i32_1 = arith.constant 0 : i32
    return %arg1, %c0_i32, %arg0, %c0_i32_0 : i32, i32, i32, i32
  }
  func.func @transform_1(%arg0: i32, %arg1: i32) -> (i32, i32, i32, i32) {
    %c0_i32 = arith.constant 0 : i32
    %c0_i32_0 = arith.constant 0 : i32
    %c0_i32_1 = arith.constant 0 : i32
    %c0_i32_2 = arith.constant 0 : i32
    %c0_i32_3 = arith.constant 0 : i32
    return %c0_i32, %c0_i32_0, %c0_i32_1, %c0_i32_2 : i32, i32, i32, i32
  }
  func.func @transform_2(%arg0: i32, %arg1: i32) -> (i32, i32, i32, i32) {
    %c0_i32 = arith.constant 0 : i32
    %c0_i32_0 = arith.constant 0 : i32
    %c0_i32_1 = arith.constant 0 : i32
    %c0_i32_2 = arith.constant 0 : i32
    %c0_i32_3 = arith.constant 0 : i32
    return %c0_i32, %c0_i32_0, %c0_i32_1, %c0_i32_2 : i32, i32, i32, i32
  }
  func.func @transform_3(%arg0: i32, %arg1: i32) -> (i32, i32, i32, i32) {
    %c0_i32 = arith.constant 0 : i32
    %c0_i32_0 = arith.constant 0 : i32
    %c0_i32_1 = arith.constant 0 : i32
    return %arg1, %c0_i32, %arg0, %c0_i32_0 : i32, i32, i32, i32
  }
}

</mosaic_0001>

<llo_original>
// kernel: tpu_custom_call.1
$region0: #{tpu_custom_call.1}
  #allocation0 [shape = 'u32[]', space=smem, size = 0x4, offset = 0x4, fixed_abs, tag = 'smem constant byte address 0x4 - core index']
  #allocation1 [shape = 'u32[144,128]{1,0:T(1,128)}', space=vmem, size = 0x12000, scoped, tag = 'internal scratch']
  %s0 = inlined_call_operand.vmem [shape: f32[2,4,1,128], index: 0, kind: input, shape index: {}]
  %s1 = inlined_call_operand.vmem [shape: f32[1,4,1,1], index: 1, kind: input, shape index: {}]
  %s2 = inlined_call_operand.vmem [shape: f32[1,4,1,1], index: 2, kind: input, shape index: {}]
  %s3 = inlined_call_operand.hbm [shape: f32[2,4,1,128], index: 3, kind: output, shape index: {}]
  %s4 = sld [smem:[#allocation0]]
  $region22: #{tpu_custom_call.1} parent=0
    _
  %s6 = ssub.s32 1, %s4
  %s7 = scalar_select 0, %s6, %s4
  $region1: #{tpu_custom_call.1} parent=0
    #allocation2 [shape = 'u8[4096]{0}', space=vmem, size = 0x1000, scoped, tag = 'output window, operand 0, single buffered']
    #allocation3 [shape = 's32[1]{0}', space=sflag, size = 0x4, scoped, tag = 'scoped memory for tpu_custom_call.1']
    %8 = vsyncpa [#allocation3], 0
    // Predicated region
    $region2: #{tpu_custom_call.1} parent=1 // pred_check
      _
    $region3: #{tpu_custom_call.1} parent=1 // pred_check_branch
      %10 = sbr.rel (0) target = $region5
    $region4: #{tpu_custom_call.1} parent=1 // pred_region
      _
    $region5: #{tpu_custom_call.1} parent=1 // pred_fallthru
      _
    // Predicated region
    $region6: #{tpu_custom_call.1} parent=1 // pred_check
      _
    $region7: #{tpu_custom_call.1} parent=1 // pred_check_branch
      %12 = sbr.rel (0) target = $region9
    $region8: #{tpu_custom_call.1} parent=1 // pred_region
      _
    $region9: #{tpu_custom_call.1} parent=1 // pred_fallthru
      _
    // Predicated region
    $region10: #{tpu_custom_call.1} parent=1 // pred_check
      _
    $region11: #{tpu_custom_call.1} parent=1 // pred_check_branch
      %14 = sbr.rel (0) target = $region13
    $region12: #{tpu_custom_call.1} parent=1 // pred_region
      _
    $region13: #{tpu_custom_call.1} parent=1 // pred_fallthru
      _
    %v15 = vld [vmem:[%s0] sm:$0x1]
    %v16 = vld [vmem:[%s0 + $0x1] sm:$0x1]
    %v17 = vld [vmem:[%s0 + $0x2] sm:$0x1]
    %v18 = vld [vmem:[%s0 + $0x3] sm:$0x1]
    %v19 = vld [vmem:[%s0 + $0x4] sm:$0x1]
    %v20 = vld [vmem:[%s0 + $0x5] sm:$0x1]
    %v21 = vld [vmem:[%s0 + $0x6] sm:$0x1]
    %v22 = vld [vmem:[%s0 + $0x7] sm:$0x1]
    %v23 = vld [vmem:[%s1] sm:$0x1]
    %v24 = vld [vmem:[%s1 + $0x1] sm:$0x1]
    %v25 = vld [vmem:[%s1 + $0x2] sm:$0x1]
    %v26 = vld [vmem:[%s1 + $0x3] sm:$0x1]
    %v27 = vld [vmem:[%s2] sm:$0x1]
    %v28 = vld [vmem:[%s2 + $0x1] sm:$0x1]
    %v29 = vld [vmem:[%s2 + $0x2] sm:$0x1]
    %v30 = vld [vmem:[%s2 + $0x3] sm:$0x1]
    %vm31 = vcmask 1040384
    %v32 = vsel %vm31, %v15, 0.0
    %v33 = vsel %vm31, %v16, 0.0
    %v34 = vadd.f32 %v32, %v33
    %v35 = vsel %vm31, %v17, 0.0
    %v36 = vadd.f32 %v34, %v35
    %v37 = vsel %vm31, %v18, 0.0
    %v38 = vadd.f32 %v36, %v37
    %v39 = vsel %vm31, %v19, 0.0
    %v40 = vsel %vm31, %v20, 0.0
    %v41 = vadd.f32 %v39, %v40
    %v42 = vsel %vm31, %v21, 0.0
    %v43 = vadd.f32 %v41, %v42
    %v44 = vsel %vm31, %v22, 0.0
    %v45 = vadd.f32 %v43, %v44
    %v46 = vmul.f32 %v38, 0.25
    %v47 = vmul.f32 %v45, 0.25
    %v48 = vsub.f32 %v15, %v46
    %v49 = vsub.f32 %v16, %v46
    %v50 = vsub.f32 %v17, %v46
    %v51 = vsub.f32 %v18, %v46
    %v52 = vsub.f32 %v19, %v47
    %v53 = vsub.f32 %v20, %v47
    %v54 = vsub.f32 %v21, %v47
    %v55 = vsub.f32 %v22, %v47
    %v56 = vmul.f32 %v48, %v48
    %v57 = vmul.f32 %v49, %v49
    %v58 = vmul.f32 %v50, %v50
    %v59 = vmul.f32 %v51, %v51
    %v60 = vmul.f32 %v52, %v52
    %v61 = vmul.f32 %v53, %v53
    %v62 = vmul.f32 %v54, %v54
    %v63 = vmul.f32 %v55, %v55
    %v64 = vsel %vm31, %v56, 0.0
    %v65 = vsel %vm31, %v57, 0.0
    %v66 = vadd.f32 %v64, %v65
    %v67 = vsel %vm31, %v58, 0.0
    %v68 = vadd.f32 %v66, %v67
    %v69 = vsel %vm31, %v59, 0.0
    %v70 = vadd.f32 %v68, %v69
    %v71 = vsel %vm31, %v60, 0.0
    %v72 = vsel %vm31, %v61, 0.0
    %v73 = vadd.f32 %v71, %v72
    %v74 = vsel %vm31, %v62, 0.0
    %v75 = vadd.f32 %v73, %v74
    %v76 = vsel %vm31, %v63, 0.0
    %v77 = vadd.f32 %v75, %v76
    %v78 = vmul.f32 %v70, 0.33333334
    %v79 = vmul.f32 %v77, 0.33333334
    %v80 = vrsqrt.pop %v78
    %v81 = vmul.f32 %v78, %v80
    %vm82 = vcmp.eq.f32.partialorder %v78, inf
    %v83 = vsel %vm82, %v78, %v81
    %vm84 = vcmp.eq.f32.partialorder %v78, 0.0
    %v85 = vand.u32 %v78, 2147483648
    %v86 = vsel %vm84, %v85, %v83
    %v87 = vrsqrt.pop %v79
    %v88 = vmul.f32 %v79, %v87
    %vm89 = vcmp.eq.f32.partialorder %v79, inf
    %v90 = vsel %vm89, %v79, %v88
    %vm91 = vcmp.eq.f32.partialorder %v79, 0.0
    %v92 = vand.u32 %v79, 2147483648
    %v93 = vsel %vm91, %v92, %v90
    %v94 = vadd.f32 %v86, 1e-06
    %v95 = vadd.f32 %v93, 1e-06
    %v96 = vrcp.pop %v94
    %v97 = vrcp.pop %v95
    %v98 = vmul.f32 %v48, %v96
    %v99 = vmul.f32 %v49, %v96
    %v100 = vmul.f32 %v50, %v96
    %v101 = vmul.f32 %v51, %v96
    %v102 = vmul.f32 %v52, %v97
    %v103 = vmul.f32 %v53, %v97
    %v104 = vmul.f32 %v54, %v97
    %v105 = vmul.f32 %v55, %v97
    %107 = vset.pattern.permute.xlu0 0
    %108 = vperm.xlu0 %107, %v23
    %v109 = vpop.permute.xlu0 %108
    %v111 = vlaneseq
    %v112 = vshrl.u32 %v111, 7
    %v113 = vsub.s32 0, %v112
    %v114 = vrot.slane %v109, %v113
    %116 = vset.pattern.permute.xlu0 0
    %117 = vperm.xlu0 %116, %v24
    %v118 = vpop.permute.xlu0 %117
    %v120 = vlaneseq
    %v121 = vshrl.u32 %v120, 7
    %v122 = vsub.s32 0, %v121
    %v123 = vrot.slane %v118, %v122
    %125 = vset.pattern.permute.xlu0 0
    %126 = vperm.xlu0 %125, %v25
    %v127 = vpop.permute.xlu0 %126
    %v129 = vlaneseq
    %v130 = vshrl.u32 %v129, 7
    %v131 = vsub.s32 0, %v130
    %v132 = vrot.slane %v127, %v131
    %134 = vset.pattern.permute.xlu0 0
    %135 = vperm.xlu0 %134, %v26
    %v136 = vpop.permute.xlu0 %135
    %v138 = vlaneseq
    %v139 = vshrl.u32 %v138, 7
    %v140 = vsub.s32 0, %v139
    %v141 = vrot.slane %v136, %v140
    %v142 = vmul.f32 %v98, %v114
    %v143 = vmul.f32 %v99, %v123
    %v144 = vmul.f32 %v100, %v132
    %v145 = vmul.f32 %v101, %v141
    %v146 = vmul.f32 %v102, %v114
    %v147 = vmul.f32 %v103, %v123
    %v148 = vmul.f32 %v104, %v132
    %v149 = vmul.f32 %v105, %v141
    %151 = vset.pattern.permute.xlu0 0
    %152 = vperm.xlu0 %151, %v27
    %v153 = vpop.permute.xlu0 %152
    %v155 = vlaneseq
    %v156 = vshrl.u32 %v155, 7
    %v157 = vsub.s32 0, %v156
    %v158 = vrot.slane %v153, %v157
    %160 = vset.pattern.permute.xlu0 0
    %161 = vperm.xlu0 %160, %v28
    %v162 = vpop.permute.xlu0 %161
    %v164 = vlaneseq
    %v165 = vshrl.u32 %v164, 7
    %v166 = vsub.s32 0, %v165
    %v167 = vrot.slane %v162, %v166
    %169 = vset.pattern.permute.xlu0 0
    %170 = vperm.xlu0 %169, %v29
    %v171 = vpop.permute.xlu0 %170
    %v173 = vlaneseq
    %v174 = vshrl.u32 %v173, 7
    %v175 = vsub.s32 0, %v174
    %v176 = vrot.slane %v171, %v175
    %178 = vset.pattern.permute.xlu0 0
    %179 = vperm.xlu0 %178, %v30
    %v180 = vpop.permute.xlu0 %179
    %v182 = vlaneseq
    %v183 = vshrl.u32 %v182, 7
    %v184 = vsub.s32 0, %v183
    %v185 = vrot.slane %v180, %v184
    %v186 = vadd.f32 %v142, %v158
    %v187 = vadd.f32 %v143, %v167
    %v188 = vadd.f32 %v144, %v176
    %v189 = vadd.f32 %v145, %v185
    %v190 = vadd.f32 %v146, %v158
    %v191 = vadd.f32 %v147, %v167
    %v192 = vadd.f32 %v148, %v176
    %v193 = vadd.f32 %v149, %v185
    %194 = vst [vmem:[#allocation2] sm:$0x1] %v186
    %195 = vst [vmem:[#allocation2 + $0x1] sm:$0x1] %v187
    %196 = vst [vmem:[#allocation2 + $0x2] sm:$0x1] %v188
    %197 = vst [vmem:[#allocation2 + $0x3] sm:$0x1] %v189
    %198 = vst [vmem:[#allocation2 + $0x4] sm:$0x1] %v190
    %199 = vst [vmem:[#allocation2 + $0x5] sm:$0x1] %v191
    %200 = vst [vmem:[#allocation2 + $0x6] sm:$0x1] %v192
    %201 = vst [vmem:[#allocation2 + $0x7] sm:$0x1] %v193
    // Predicated region
    $region14: #{tpu_custom_call.1} parent=1 // pred_check
      _
    $region15: #{tpu_custom_call.1} parent=1 // pred_check_branch
      %203 = sbr.rel (0) target = $region17
    $region16: #{tpu_custom_call.1} parent=1 // pred_region
      %s205 = ssub.s32 128, 128
      %206 = vsyncadd [#allocation3], %s205
      %s207 = sshll.u32 [#allocation2], 4
      %s208 = int_to_ptr.vmem [resolvable:$true] %s207
      %213 = dma.vmem_to_hbm [thread:$0]  %s208, 128, %s3, [#allocation3], 16, 16, 1
    $region17: #{tpu_custom_call.1} parent=1 // pred_fallthru
      _
    // Predicated region
    $region18: #{tpu_custom_call.1} parent=1 // pred_check
      _
    $region19: #{tpu_custom_call.1} parent=1 // pred_check_branch
      %215 = sbr.rel (0) target = $region21
    $region20: #{tpu_custom_call.1} parent=1 // pred_region
      %216 = dma.done [#allocation3], 128
    $region21: #{tpu_custom_call.1} parent=1 // pred_fallthru
      _
    %217 = vsyncpa [#allocation3], 1

</llo_original>
